<compile_context>
chip_gen: v7x
topology: tpu7x:2x2x1
jax: 0.10.0
libtpu: 0.0.40
codegen_flags: <defaults>
</compile_context>

<pallas_src>
import jax
import jax.numpy as jnp
from jax import lax
from jax.experimental import pallas as pl
from jax.experimental.pallas import tpu as pltpu


# ---------------------------------------------------------------------------
# Generation-aware VMEM budgets
# ---------------------------------------------------------------------------
def _vmem_budgets():
    """Returns (scoped_vmem_limit_bytes, block_budget_bytes)."""
    cap = 64 * 1024 * 1024  # conservative default (v7x per-TensorCore VMEM)
    try:
        info = pltpu.get_tpu_info()
        cap_attr = getattr(info, "vmem_capacity_bytes", None)
        if cap_attr:
            cap = int(cap_attr)
    except Exception:
        pass
    if cap >= 96 * 1024 * 1024:       # v5e / v6e: 128 MiB physical VMEM
        scoped = 64 * 1024 * 1024
    else:                             # v7x: 64 MiB physical VMEM per TC
        scoped = 40 * 1024 * 1024
    block_budget = int(scoped * 0.7)  # headroom for compiler scratch / sems
    return scoped, block_budget


def _sublane_multiple(dtype):
    itemsize = jnp.dtype(dtype).itemsize
    if itemsize >= 4:
        return 8
    if itemsize == 2:
        return 16
    return 32


def _round_down(x, mult):
    return max(mult, (x // mult) * mult)


def _cdiv(a, b):
    return -(-a // b)


# ---------------------------------------------------------------------------
# Kernels
# ---------------------------------------------------------------------------
def _proj_skip_single_kernel(x_ref, w_ref, skip_ref, o_ref):
    """out = x @ W^T + skip with a single K step: no accumulator scratch."""
    acc = lax.dot_general(
        x_ref[...], w_ref[...],
        dimension_numbers=(((1,), (1,)), ((), ())),   # contract in_dim of both
        preferred_element_type=jnp.float32,
    )
    o_ref[...] = (acc + skip_ref[...].astype(jnp.float32)).astype(o_ref.dtype)


def _proj_skip_multik_kernel(x_ref, w_ref, skip_ref, o_ref, acc_ref):
    """K-tiled fallback (very large in_dim): assign on k==0, += afterwards,
    fused skip-add + writeback on the last K step (no zero-fill store)."""
    k = pl.program_id(2)
    part = lax.dot_general(
        x_ref[...], w_ref[...],
        dimension_numbers=(((1,), (1,)), ((), ())),
        preferred_element_type=jnp.float32,
    )

    @pl.when(k == 0)
    def _():
        acc_ref[...] = part

    @pl.when(k > 0)
    def _():
        acc_ref[...] += part

    @pl.when(k == pl.num_programs(2) - 1)
    def _():
        o_ref[...] = (
            acc_ref[...] + skip_ref[...].astype(jnp.float32)
        ).astype(o_ref.dtype)


def _add_kernel(a_ref, b_ref, o_ref):
    """Pure skip add (in_dim == out_dim): elementwise on the VPU."""
    o_ref[...] = (a_ref[...] + b_ref[...]).astype(o_ref.dtype)


# ---------------------------------------------------------------------------
# Tiling helpers (plain Python, trace-time only)
# ---------------------------------------------------------------------------
def _choose_tn(out_dim, in_dim, db, budget):
    """N tile so the double-buffered weight slice takes <= ~1/3 of the budget."""
    w_budget = budget // 3
    if 2 * out_dim * in_dim * db <= w_budget:
        return out_dim                    # whole N: weight fully VMEM-resident
    for cand in (1024, 512, 256, 128):
        if cand < out_dim and 2 * cand * in_dim * db <= w_budget:
            return cand
    return min(out_dim, 128)


def _choose_tm_single(m, in_dim, tn, db, budget, sub):
    """M tile for the full-K kernel; None if full-K cannot fit the budget."""
    w_bytes = 2 * tn * in_dim * db                # weight slice, double buffered
    per_row = 2 * in_dim * db + 4 * tn * db       # x (2x) + skip (2x) + out (2x)
    avail = budget - w_bytes
    if avail < sub * per_row:
        return None
    tm_cap = avail // per_row
    tm_target = 1024 if db <= 2 else 512
    hi = min(tm_cap, tm_target)
    if m <= hi:
        return m
    return _round_down(hi, sub)


def _choose_tk(in_dim, max_tk=2048):
    """Exact multiple-of-128 divisor of in_dim (partial K tiles would corrupt
    the contraction); None if none exists."""
    hi = (min(max_tk, in_dim) // 128) * 128
    for cand in range(hi, 0, -128):
        if in_dim % cand == 0:
            return cand
    return None


def _choose_tm_multik(m, tk, tn, db, budget, sub):
    w_bytes = 2 * tn * tk * db
    per_row = 2 * tk * db + 4 * tn * db + 4 * tn  # + f32 accumulator row
    avail = max(budget - w_bytes, sub * per_row)
    tm_cap = avail // per_row
    tm_target = 1024 if db <= 2 else 512
    hi = min(tm_cap, tm_target)
    if m <= hi:
        return m
    return _round_down(hi, sub)


def _lane_dense_shape(total, m, d):
    """2-D view of a flat [total] buffer with a lane-dense (x128) last dim."""
    for lane in (2048, 1024, 512, 256, 128):
        if total % lane == 0:
            return total // lane, lane
    return m, d  # fallback: original 2-D layout


# ---------------------------------------------------------------------------
# Wrapper
# ---------------------------------------------------------------------------
def skip_connection(in_x, out_x, weight=None, in_dim=None, out_dim=None):
    """Pallas SkipConnection forward.

    in_x:   [batch, seq, in_dim]
    out_x:  [batch, seq, out_dim]
    weight: [out_dim, in_dim]  (native PyTorch nn.Linear layout); ignored
            (may be None) when in_dim == out_dim, matching the module.
    """
    b, s, _ = in_x.shape
    if in_dim is None:
        in_dim = in_x.shape[-1]
    if out_dim is None:
        out_dim = out_x.shape[-1]
    m = b * s
    db = jnp.dtype(in_x.dtype).itemsize
    sub = _sublane_multiple(in_x.dtype)
    scoped_vmem, budget = _vmem_budgets()

    # ------------------- in_dim == out_dim: pure skip add -------------------
    if in_dim == out_dim:
        total = m * out_dim
        rows, lane = _lane_dense_shape(total, m, out_dim)
        a2 = in_x.reshape(rows, lane)
        c2 = out_x.reshape(rows, lane)

        per_row_bytes = lane * db
        block_cap = min(budget // 6, 12 * 1024 * 1024)  # 3 arrays x 2 buffers
        tr_cap = _round_down(max(block_cap // per_row_bytes, sub), sub)
        tr = rows if rows <= tr_cap else tr_cap
        # guarantee >=2 parallel tiles (megacore) when there is enough work
        if _cdiv(rows, tr) == 1 and rows >= max(2 * sub, 256):
            tr = _round_down(rows // 2, sub)

        out2 = pl.pallas_call(
            _add_kernel,
            out_shape=jax.ShapeDtypeStruct((rows, lane), out_x.dtype),
            grid_spec=pltpu.PrefetchScalarGridSpec(
                num_scalar_prefetch=0,
                grid=(_cdiv(rows, tr),),
                in_specs=[
                    pl.BlockSpec((tr, lane), lambda i: (i, 0)),
                    pl.BlockSpec((tr, lane), lambda i: (i, 0)),
                ],
                out_specs=pl.BlockSpec((tr, lane), lambda i: (i, 0)),
            ),
            compiler_params=pltpu.CompilerParams(
                dimension_semantics=("parallel",),
                vmem_limit_bytes=scoped_vmem,
            ),
            cost_estimate=pl.CostEstimate(
                flops=total, transcendentals=0,
                bytes_accessed=3 * total * db,
            ),
        )(a2, c2)
        return out2.reshape(b, s, out_dim)

    # ---------------- projection + skip (fused matmul + add) ----------------
    x2d = in_x.reshape(m, in_dim)
    skip2d = out_x.reshape(m, out_dim)

    tn = _choose_tn(out_dim, in_dim, db, budget)
    num_n = _cdiv(out_dim, tn)

    cost = pl.CostEstimate(
        flops=2 * m * in_dim * out_dim,
        transcendentals=0,
        bytes_accessed=(m * in_dim + in_dim * out_dim + 2 * m * out_dim) * db,
    )

    tm = _choose_tm_single(m, in_dim, tn, db, budget, sub)
    tk = None if tm is not None else _choose_tk(in_dim)

    if tm is not None or tk is None:
        # ---- single K step: no accumulator, direct fused writeback ----
        if tm is None:
            # Full-K over budget and in_dim has no clean multiple-of-128
            # divisor: use the minimal M tile and rely on the scoped limit.
            # TODO(synk): unreachable for realistic GCN dims.
            tm = min(m, sub)
        num_m = _cdiv(m, tm)
        # guarantee >=2 tiles on a parallel axis (v7x megacore) when worthwhile
        if num_m == 1 and num_n == 1 and m >= max(2 * sub, 256):
            tm = _round_down(m // 2, sub)
            num_m = _cdiv(m, tm)

        out2d = pl.pallas_call(
            _proj_skip_single_kernel,
            out_shape=jax.ShapeDtypeStruct((m, out_dim), out_x.dtype),
            grid_spec=pltpu.PrefetchScalarGridSpec(
                num_scalar_prefetch=0,
                grid=(num_n, num_m),          # M innermost: the weight slice
                in_specs=[                    # is fetched once per N tile only
                    pl.BlockSpec((tm, in_dim), lambda j, i: (i, 0)),   # x
                    pl.BlockSpec((tn, in_dim), lambda j, i: (j, 0)),   # W (resident over M)
                    pl.BlockSpec((tm, tn), lambda j, i: (i, j)),       # skip
                ],
                out_specs=pl.BlockSpec((tm, tn), lambda j, i: (i, j)),
            ),
            compiler_params=pltpu.CompilerParams(
                dimension_semantics=("parallel", "parallel"),
                vmem_limit_bytes=scoped_vmem,
            ),
            cost_estimate=cost,
        )(x2d, weight, skip2d)
        return out2d.reshape(b, s, out_dim)

    # ---- multi-K fallback (very large in_dim only) ----
    # NOTE: with K tiled the weight block index depends on (j, k), so the
    # weight is re-streamed once per M tile here; this path only triggers when
    # in_dim is too large for any full-K weight slice to stay VMEM-resident.
    tm = _choose_tm_multik(m, tk, tn, db, budget, sub)
    num_m = _cdiv(m, tm)
    num_k = in_dim // tk

    out2d = pl.pallas_call(
        _proj_skip_multik_kernel,
        out_shape=jax.ShapeDtypeStruct((m, out_dim), out_x.dtype),
        grid_spec=pltpu.PrefetchScalarGridSpec(
            num_scalar_prefetch=0,
            grid=(num_n, num_m, num_k),
            in_specs=[
                pl.BlockSpec((tm, tk), lambda j, i, k: (i, k)),   # x
                pl.BlockSpec((tn, tk), lambda j, i, k: (j, k)),   # W
                pl.BlockSpec((tm, tn), lambda j, i, k: (i, j)),   # skip
            ],
            out_specs=pl.BlockSpec((tm, tn), lambda j, i, k: (i, j)),
            scratch_shapes=[pltpu.VMEM((tm, tn), jnp.float32)],
        ),
        compiler_params=pltpu.CompilerParams(
            dimension_semantics=("parallel", "parallel", "arbitrary"),
            vmem_limit_bytes=scoped_vmem,
        ),
        cost_estimate=cost,
    )(x2d, weight, skip2d)
    return out2d.reshape(b, s, out_dim)


# ---------------------------------------------------------------------------
# Demo / correctness check
# ---------------------------------------------------------------------------
if __name__ == "__main__":
    # Small shapes consistent with the module's forward.
    batch, seq = 2, 8
    in_dim, out_dim = 128, 256

    key = jax.random.PRNGKey(0)
    k_in, k_out, k_w = jax.random.split(key, 3)

    in_x = jax.random.normal(k_in, (batch, seq, in_dim), dtype=jnp.float32)
    out_x = jax.random.normal(k_out, (batch, seq, out_dim), dtype=jnp.float32)
    # Weight in native PyTorch nn.Linear layout [out_dim, in_dim]; consumed
    # directly (no transpose anywhere in the hot path).
    w = jax.random.normal(k_w, (out_dim, in_dim), dtype=jnp.float32) * 0.1

    # Projection path (in_dim != out_dim).
    result = jax.block_until_ready(skip_connection(in_x, out_x, w, in_dim, out_dim))
    ref = (
        jnp.einsum("bsi,oi->bso", in_x, w, precision=lax.Precision.HIGHEST)
        + out_x
    )
    assert result.shape == (batch, seq, out_dim)
    assert jnp.allclose(result, ref, atol=1e-4, rtol=1e-4), "projection path mismatch"

    # in_dim == out_dim path (the module skips the Linear -> pure skip add).
    same = jax.block_until_ready(skip_connection(out_x, out_x, None, out_dim, out_dim))
    assert jnp.allclose(same, out_x + out_x, atol=1e-6), "add path mismatch"

    print("KERNEL_OK")
</pallas_src>

<mosaic_0001>
module attributes {stable_mosaic.version = 11 : i64} {
  func.func @_proj_skip_single_kernel(%arg0: i32, %arg1: i32, %arg2: memref<16x128xf32, #tpu.memory_space<vmem>>, %arg3: memref<256x128xf32, #tpu.memory_space<vmem>>, %arg4: memref<16x256xf32, #tpu.memory_space<vmem>>, %arg5: memref<16x256xf32, #tpu.memory_space<vmem>>) attributes {dimension_semantics = [#tpu.dimension_semantics<parallel>, #tpu.dimension_semantics<parallel>], iteration_bounds = array<i64: 1, 1>, scalar_prefetch = 0 : i64, scratch_operands = 0 : i64, tpu.core_type = #tpu.core_type<tc>, window_params = [{transform_indices = @transform_0, window_bounds = array<i64: 16, 128>}, {transform_indices = @transform_1, window_bounds = array<i64: 256, 128>}, {transform_indices = @transform_2, window_bounds = array<i64: 16, 256>}, {transform_indices = @transform_3, window_bounds = array<i64: 16, 256>}]} {
    %c0 = arith.constant 0 : index
    %c0_0 = arith.constant 0 : index
    %0 = vector.load %arg2[%c0, %c0_0] : memref<16x128xf32, #tpu.memory_space<vmem>>, vector<16x128xf32>
    %c0_1 = arith.constant 0 : index
    %c0_2 = arith.constant 0 : index
    %1 = vector.load %arg3[%c0_1, %c0_2] : memref<256x128xf32, #tpu.memory_space<vmem>>, vector<256x128xf32>
    %cst = arith.constant dense<0.000000e+00> : vector<16x256xf32>
    %2 = tpu.matmul %0, %1, %cst {dimension_numbers = #tpu.dot_dimension_numbers<[1], [1], [0], [0], [0, 0, 1, 0], [], []>} : vector<16x128xf32>, vector<256x128xf32>, vector<16x256xf32> -> vector<16x256xf32>
    %c0_3 = arith.constant 0 : index
    %c0_4 = arith.constant 0 : index
    %3 = vector.load %arg4[%c0_3, %c0_4] : memref<16x256xf32, #tpu.memory_space<vmem>>, vector<16x256xf32>
    %4 = arith.addf %2, %3 : vector<16x256xf32>
    %c0_5 = arith.constant 0 : index
    %c0_6 = arith.constant 0 : index
    %5 = vector.load %arg5[%c0_5, %c0_6] : memref<16x256xf32, #tpu.memory_space<vmem>>, vector<16x256xf32>
    tpu.vector_store %arg5[%c0_5, %c0_6], %4 {strides = array<i32>} : memref<16x256xf32, #tpu.memory_space<vmem>>, vector<16x256xf32>,
    return
  }
  func.func @transform_0(%arg0: i32, %arg1: i32) -> (i32, i32) {
    %c0_i32 = arith.constant 0 : i32
    %c0_i32_0 = arith.constant 0 : i32
    return %arg1, %c0_i32 : i32, i32
  }
  func.func @transform_1(%arg0: i32, %arg1: i32) -> (i32, i32) {
    %c0_i32 = arith.constant 0 : i32
    %c0_i32_0 = arith.constant 0 : i32
    return %arg0, %c0_i32 : i32, i32
  }
  func.func @transform_2(%arg0: i32, %arg1: i32) -> (i32, i32) {
    %c0_i32 = arith.constant 0 : i32
    return %arg1, %arg0 : i32, i32
  }
  func.func @transform_3(%arg0: i32, %arg1: i32) -> (i32, i32) {
    %c0_i32 = arith.constant 0 : i32
    return %arg1, %arg0 : i32, i32
  }
}

</mosaic_0001>

<llo_original>
// kernel: tpu_custom_call.1
$region0: #{tpu_custom_call.1}
  #allocation0 [shape = 'u32[]', space=smem, size = 0x4, offset = 0x4, fixed_abs, tag = 'smem constant byte address 0x4 - core index']
  #allocation1 [shape = 'u32[144,128]{1,0:T(1,128)}', space=vmem, size = 0x12000, scoped, tag = 'internal scratch']
  %s0 = inlined_call_operand.hbm [shape: f32[16,128], index: 0, kind: input, shape index: {}]
  %s1 = inlined_call_operand.hbm [shape: f32[256,128], index: 1, kind: input, shape index: {}]
  %s2 = inlined_call_operand.hbm [shape: f32[16,256], index: 2, kind: input, shape index: {}]
  %s3 = inlined_call_operand.hbm [shape: f32[16,256], index: 3, kind: output, shape index: {}]
  %s4 = sld [smem:[#allocation0]]
  $region34: #{tpu_custom_call.1} parent=0
    _
  %s6 = ssub.s32 1, %s4
  %s7 = scalar_select 0, %s6, %s4
  $region1: #{tpu_custom_call.1} parent=0
    #allocation2 [shape = 'u8[8192]{0}', space=vmem, size = 0x2000, scoped, tag = 'input window, operand 0, single buffered']
    #allocation3 [shape = 's32[1]{0}', space=sflag, size = 0x4, scoped, tag = 'scoped memory for tpu_custom_call.1']
    #allocation4 [shape = 's32[1]{0}', space=sflag, size = 0x4, scoped, tag = 'scoped memory for tpu_custom_call.1']
    #allocation5 [shape = 'u8[131072]{0}', space=vmem, size = 0x20000, scoped, tag = 'input window, operand 1, single buffered']
    #allocation6 [shape = 's32[1]{0}', space=sflag, size = 0x4, scoped, tag = 'scoped memory for tpu_custom_call.1']
    #allocation7 [shape = 'u8[16384]{0}', space=vmem, size = 0x4000, scoped, tag = 'input window, operand 2, single buffered']
    #allocation8 [shape = 'u8[16384]{0}', space=vmem, size = 0x4000, scoped, tag = 'output window, operand 0, single buffered']
    %8 = vsyncpa [#allocation3], 0
    %9 = vsyncpa [#allocation6], 0
    %10 = vsyncpa [#allocation4], 0
    // Predicated region
    $region2: #{tpu_custom_call.1} parent=1 // pred_check
      _
    $region3: #{tpu_custom_call.1} parent=1 // pred_check_branch
      %12 = sbr.rel (0) target = $region5
    $region4: #{tpu_custom_call.1} parent=1 // pred_region
      %s14 = ssub.s32 256, 256
      %15 = vsyncadd [#allocation3], %s14
      %s16 = sshll.u32 [#allocation2], 4
      %s17 = int_to_ptr.vmem [resolvable:$true] %s16
      %22 = dma.hbm_to_vmem [thread:$0]  %s0, 256, %s17, [#allocation3], 128, 128, 8
    $region5: #{tpu_custom_call.1} parent=1 // pred_fallthru
      _
    // Predicated region
    $region6: #{tpu_custom_call.1} parent=1 // pred_check
      _
    $region7: #{tpu_custom_call.1} parent=1 // pred_check_branch
      %24 = sbr.rel (0) target = $region9
    $region8: #{tpu_custom_call.1} parent=1 // pred_region
      %s26 = ssub.s32 4096, 4096
      %27 = vsyncadd [#allocation6], %s26
      %s28 = sshll.u32 [#allocation5], 4
      %s29 = int_to_ptr.vmem [resolvable:$true] %s28
      %34 = dma.hbm_to_vmem [thread:$0]  %s1, 4096, %s29, [#allocation6], 128, 128, 8
    $region9: #{tpu_custom_call.1} parent=1 // pred_fallthru
      _
    // Predicated region
    $region10: #{tpu_custom_call.1} parent=1 // pred_check
      _
    $region11: #{tpu_custom_call.1} parent=1 // pred_check_branch
      %36 = sbr.rel (0) target = $region13
    $region12: #{tpu_custom_call.1} parent=1 // pred_region
      %s38 = ssub.s32 512, 512
      %39 = vsyncadd [#allocation6], %s38
      %s40 = sshll.u32 [#allocation7], 4
      %s41 = int_to_ptr.vmem [resolvable:$true] %s40
      %46 = dma.hbm_to_vmem [thread:$0]  %s2, 512, %s41, [#allocation6], 256, 256, 16
    $region13: #{tpu_custom_call.1} parent=1 // pred_fallthru
      _
    // Predicated region
    $region14: #{tpu_custom_call.1} parent=1 // pred_check
      _
    $region15: #{tpu_custom_call.1} parent=1 // pred_check_branch
      %48 = sbr.rel (0) target = $region17
    $region16: #{tpu_custom_call.1} parent=1 // pred_region
      %49 = dma.done [#allocation3], 256
    $region17: #{tpu_custom_call.1} parent=1 // pred_fallthru
      _
    // Predicated region
    $region18: #{tpu_custom_call.1} parent=1 // pred_check
      _
    $region19: #{tpu_custom_call.1} parent=1 // pred_check_branch
      %51 = sbr.rel (0) target = $region21
    $region20: #{tpu_custom_call.1} parent=1 // pred_region
      %52 = dma.done [#allocation6], 4096
    $region21: #{tpu_custom_call.1} parent=1 // pred_fallthru
      _
    // Predicated region
    $region22: #{tpu_custom_call.1} parent=1 // pred_check
      _
    $region23: #{tpu_custom_call.1} parent=1 // pred_check_branch
      %54 = sbr.rel (0) target = $region25
    $region24: #{tpu_custom_call.1} parent=1 // pred_region
      %55 = dma.done [#allocation6], 512
    $region25: #{tpu_custom_call.1} parent=1 // pred_fallthru
      _
    %v56 = vld [vmem:[#allocation2] sm:$0xff]
    %v57 = vld [vmem:[#allocation2 + $0x8] sm:$0xff]
    %v58 = vld [vmem:[#allocation5] sm:$0xff]
    %v59 = vld [vmem:[#allocation5 + $0x8] sm:$0xff]
    %v60 = vld [vmem:[#allocation5 + $0x10] sm:$0xff]
    %v61 = vld [vmem:[#allocation5 + $0x18] sm:$0xff]
    %v62 = vld [vmem:[#allocation5 + $0x20] sm:$0xff]
    %v63 = vld [vmem:[#allocation5 + $0x28] sm:$0xff]
    %v64 = vld [vmem:[#allocation5 + $0x30] sm:$0xff]
    %v65 = vld [vmem:[#allocation5 + $0x38] sm:$0xff]
    %v66 = vld [vmem:[#allocation5 + $0x40] sm:$0xff]
    %v67 = vld [vmem:[#allocation5 + $0x48] sm:$0xff]
    %v68 = vld [vmem:[#allocation5 + $0x50] sm:$0xff]
    %v69 = vld [vmem:[#allocation5 + $0x58] sm:$0xff]
    %v70 = vld [vmem:[#allocation5 + $0x60] sm:$0xff]
    %v71 = vld [vmem:[#allocation5 + $0x68] sm:$0xff]
    %v72 = vld [vmem:[#allocation5 + $0x70] sm:$0xff]
    %v73 = vld [vmem:[#allocation5 + $0x78] sm:$0xff]
    %v74 = vld [vmem:[#allocation5 + $0x80] sm:$0xff]
    %v75 = vld [vmem:[#allocation5 + $0x88] sm:$0xff]
    %v76 = vld [vmem:[#allocation5 + $0x90] sm:$0xff]
    %v77 = vld [vmem:[#allocation5 + $0x98] sm:$0xff]
    %v78 = vld [vmem:[#allocation5 + $0xa0] sm:$0xff]
    %v79 = vld [vmem:[#allocation5 + $0xa8] sm:$0xff]
    %v80 = vld [vmem:[#allocation5 + $0xb0] sm:$0xff]
    %v81 = vld [vmem:[#allocation5 + $0xb8] sm:$0xff]
    %v82 = vld [vmem:[#allocation5 + $0xc0] sm:$0xff]
    %v83 = vld [vmem:[#allocation5 + $0xc8] sm:$0xff]
    %v84 = vld [vmem:[#allocation5 + $0xd0] sm:$0xff]
    %v85 = vld [vmem:[#allocation5 + $0xd8] sm:$0xff]
    %v86 = vld [vmem:[#allocation5 + $0xe0] sm:$0xff]
    %v87 = vld [vmem:[#allocation5 + $0xe8] sm:$0xff]
    %v88 = vld [vmem:[#allocation5 + $0xf0] sm:$0xff]
    %v89 = vld [vmem:[#allocation5 + $0xf8] sm:$0xff]
    %v90 = vld [vmem:[#allocation7] sm:$0xff]
    %v91 = vld [vmem:[#allocation7 + $0x8] sm:$0xff]
    %v92 = vld [vmem:[#allocation7 + $0x10] sm:$0xff]
    %v93 = vld [vmem:[#allocation7 + $0x18] sm:$0xff]
    %94 = vmatprep.subr.mxu0 0.0
    %95 = vmatpush1.xpose.msra.mxu0 %v58
    %96 = vmatprep.subr.mxu0 0.0
    %97 = vmatpush1.xpose.msra.mxu0 %v59
    %98 = vmatprep.subr.mxu0 0.0
    %99 = vmatpush1.xpose.msra.mxu0 %v60
    %100 = vmatprep.subr.mxu0 0.0
    %101 = vmatpush1.xpose.msra.mxu0 %v61
    %102 = vmatprep.subr.mxu0 0.0
    %103 = vmatpush1.xpose.msra.mxu0 %v62
    %104 = vmatprep.subr.mxu0 0.0
    %105 = vmatpush1.xpose.msra.mxu0 %v63
    %106 = vmatprep.subr.mxu0 0.0
    %107 = vmatpush1.xpose.msra.mxu0 %v64
    %108 = vmatprep.subr.mxu0 0.0
    %109 = vmatpush1.xpose.msra.mxu0 %v65
    %110 = vmatprep.subr.mxu0 0.0
    %111 = vmatpush1.xpose.msra.mxu0 %v66
    %112 = vmatprep.subr.mxu0 0.0
    %113 = vmatpush1.xpose.msra.mxu0 %v67
    %114 = vmatprep.subr.mxu0 0.0
    %115 = vmatpush1.xpose.msra.mxu0 %v68
    %116 = vmatprep.subr.mxu0 0.0
    %117 = vmatpush1.xpose.msra.mxu0 %v69
    %118 = vmatprep.subr.mxu0 0.0
    %119 = vmatpush1.xpose.msra.mxu0 %v70
    %120 = vmatprep.subr.mxu0 0.0
    %121 = vmatpush1.xpose.msra.mxu0 %v71
    %122 = vmatprep.subr.mxu0 0.0
    %123 = vmatpush1.xpose.msra.mxu0 %v72
    %124 = vmatprep.subr.mxu0 0.0
    %125 = vmatpush1.xpose.msra.mxu0 %v73
    %126 = vmatprep.subr.mxu0 0.0
    %127 = vmatpush1.xpose.msra.mxu0 %v74
    %128 = vmatprep.subr.mxu0 0.0
    %129 = vmatpush1.xpose.msra.mxu0 %v75
    %130 = vmatprep.subr.mxu0 0.0
    %131 = vmatpush1.xpose.msra.mxu0 %v76
    %132 = vmatprep.subr.mxu0 0.0
    %133 = vmatpush1.xpose.msra.mxu0 %v77
    %134 = vmatprep.subr.mxu0 0.0
    %135 = vmatpush1.xpose.msra.mxu0 %v78
    %136 = vmatprep.subr.mxu0 0.0
    %137 = vmatpush1.xpose.msra.mxu0 %v79
    %138 = vmatprep.subr.mxu0 0.0
    %139 = vmatpush1.xpose.msra.mxu0 %v80
    %140 = vmatprep.subr.mxu0 0.0
    %141 = vmatpush1.xpose.msra.mxu0 %v81
    %142 = vmatprep.subr.mxu0 0.0
    %143 = vmatpush1.xpose.msra.mxu0 %v82
    %144 = vmatprep.subr.mxu0 0.0
    %145 = vmatpush1.xpose.msra.mxu0 %v83
    %146 = vmatprep.subr.mxu0 0.0
    %147 = vmatpush1.xpose.msra.mxu0 %v84
    %148 = vmatprep.subr.mxu0 0.0
    %149 = vmatpush1.xpose.msra.mxu0 %v85
    %150 = vmatprep.subr.mxu0 0.0
    %151 = vmatpush1.xpose.msra.mxu0 %v86
    %152 = vmatprep.subr.mxu0 0.0
    %153 = vmatpush1.xpose.msra.mxu0 %v87
    %154 = vmatprep.subr.mxu0 0.0
    %155 = vmatpush1.xpose.msra.mxu0 %v88
    %156 = vmatprep.subr.mxu0 0.0
    %157 = vmatpush1.xpose.msra.mxu0 %v89
    %158 = vmatprep.mubr.f32.mxu0 0.0
    %159 = vmatmul.mubr.f32.gmra.mrb[0].mxu0 %v56
    %v160 = vpop.f32.mrb[0].mxu0
    %v161 = vadd.f32 %v90, %v160
    %v162 = vpop.f32.mrb[0].mxu0
    %v163 = vadd.f32 %v91, %v162
    %164 = vmatprep.mubr.f32.mxu0 0.0
    %165 = vmatmul.mubr.f32.gmra.mrb[0].mxu0 %v57
    %v166 = vpop.f32.mrb[0].mxu0
    %v167 = vadd.f32 %v92, %v166
    %v168 = vpop.f32.mrb[0].mxu0
    %v169 = vadd.f32 %v93, %v168
    %170 = vdwg.mxu0
    %171 = vst [vmem:[#allocation8] sm:$0xff] %v161
    %172 = vst [vmem:[#allocation8 + $0x8] sm:$0xff] %v163
    %173 = vst [vmem:[#allocation8 + $0x10] sm:$0xff] %v167
    %174 = vst [vmem:[#allocation8 + $0x18] sm:$0xff] %v169
    // Predicated region
    $region26: #{tpu_custom_call.1} parent=1 // pred_check
      _
    $region27: #{tpu_custom_call.1} parent=1 // pred_check_branch
      %176 = sbr.rel (0) target = $region29
    $region28: #{tpu_custom_call.1} parent=1 // pred_region
      %s178 = ssub.s32 512, 512
      %179 = vsyncadd [#allocation4], %s178
      %s180 = sshll.u32 [#allocation8], 4
      %s181 = int_to_ptr.vmem [resolvable:$true] %s180
      %186 = dma.vmem_to_hbm [thread:$0]  %s181, 512, %s3, [#allocation4], 256, 256, 16
    $region29: #{tpu_custom_call.1} parent=1 // pred_fallthru
      _
    // Predicated region
    $region30: #{tpu_custom_call.1} parent=1 // pred_check
      _
    $region31: #{tpu_custom_call.1} parent=1 // pred_check_branch
      %188 = sbr.rel (0) target = $region33
    $region32: #{tpu_custom_call.1} parent=1 // pred_region
      %189 = dma.done [#allocation4], 512
    $region33: #{tpu_custom_call.1} parent=1 // pred_fallthru
      _
    %190 = vsyncpa [#allocation3], 1
    %191 = vsyncpa [#allocation6], 1
    %192 = vsyncpa [#allocation4], 1

</llo_original>
